<compile_context>
chip_gen: v5e
topology: v5e:2x2
jax: 0.10.0
libtpu: 0.0.40
codegen_flags: <defaults>
</compile_context>

<pallas_src>
import functools

import jax
import jax.numpy as jnp
import numpy as np
from jax.experimental import pallas as pl
from jax.experimental.pallas import tpu as pltpu


# ----------------------------- Pallas kernel ------------------------------ #

def _causal_shift(x, s):
    """shifted[:, t] = x[:, t - s] for t >= s, else 0 (causal time shift)."""
    if s == 0:
        return x
    L = x.shape[-1]
    if s >= L:
        return jnp.zeros_like(x)
    rolled = pltpu.roll(x, shift=s, axis=x.ndim - 1)      # XLU, MXU stays free
    t = jax.lax.broadcasted_iota(jnp.int32, x.shape, x.ndim - 1)
    return jnp.where(t >= s, rolled, 0.0)


def _causal_conv(h, w_ref, b_ref, shifts):
    """Causal dilated conv as ONE MXU matmul with contraction K = k*C_in.

    h      : (C_in, L) f32
    w_ref  : (C_out, k*C_in)  -- block j of columns is the tap-j weight
    b_ref  : (C_out, 1)
    shifts : static per-tap time shifts, shifts[j] = (k-1-j)*dilation
    """
    stacked = jnp.concatenate([_causal_shift(h, s) for s in shifts], axis=0)
    return jnp.dot(w_ref[...], stacked,
                   preferred_element_type=jnp.float32) + b_ref[...]


def _tcn_kernel(*refs, layer_specs):
    """All TemporalBlocks fused, one batch element per grid step.

    refs = (x_ref, <per-layer params...>, o_ref)
      per layer: w1 (C_out, k*C_in), b1 (C_out, 1),
                 w2 (C_out, k*C_out), b2 (C_out, 1),
                 [wd (C_out, C_in), bd (C_out, 1)]   if downsample
    """
    x_ref = refs[0]
    o_ref = refs[-1]
    params = refs[1:-1]

    h = x_ref[0].astype(jnp.float32)          # (C_in, L), lives in vregs/VMEM
    idx = 0
    for spec in layer_specs:                   # static Python loop over layers
        w1, b1, w2, b2 = params[idx:idx + 4]
        idx += 4
        if spec["has_downsample"]:
            wd, bd = params[idx:idx + 2]
            idx += 2
        else:
            wd = bd = None
        shifts = spec["shifts"]

        # conv1 -> chomp -> relu -> dropout(identity)
        h1 = jnp.maximum(_causal_conv(h, w1, b1, shifts), 0.0)
        # conv2 -> chomp -> relu -> dropout(identity)
        h2 = jnp.maximum(_causal_conv(h1, w2, b2, shifts), 0.0)

        if wd is not None:
            res = jnp.dot(wd[...], h, preferred_element_type=jnp.float32) + bd[...]
        else:
            res = h
        h = jnp.maximum(h2 + res, 0.0)         # residual + final ReLU

    o_ref[0] = h.astype(o_ref.dtype)


# ------------------------------ glue / call -------------------------------- #

def tcn_forward_pallas(x, layers, kernel_size):
    """Fused TCN forward: one pallas_call for the whole stack of blocks."""
    B, C_in, L = x.shape
    k = kernel_size

    def _full_spec(arr):
        return pl.BlockSpec(arr.shape, lambda b, _n=arr.ndim: (0,) * _n)

    args = [x]
    in_specs = [pl.BlockSpec((1, C_in, L), lambda b: (b, 0, 0))]
    layer_specs = []

    c_prev = C_in
    for layer in layers:
        d = layer["dilation"]
        c_out = layer["w1"].shape[0]
        shifts = tuple((k - 1 - j) * d for j in range(k))

        # Fold the k taps into the contraction dim:
        # (C_out, C_in, k) -> (C_out, k*C_in), column block j == w[:, :, j].
        w1f = jnp.transpose(layer["w1"], (0, 2, 1)).reshape(c_out, k * c_prev)
        w2f = jnp.transpose(layer["w2"], (0, 2, 1)).reshape(c_out, k * c_out)
        b1 = layer["b1"][:, None]
        b2 = layer["b2"][:, None]

        layer_args = [w1f, b1, w2f, b2]
        has_ds = layer["wd"] is not None
        if has_ds:
            layer_args += [layer["wd"], layer["bd"][:, None]]

        for a in layer_args:
            args.append(a)
            in_specs.append(_full_spec(a))
        layer_specs.append(dict(shifts=shifts, has_downsample=has_ds))
        c_prev = c_out

    c_last = c_prev
    return pl.pallas_call(
        functools.partial(_tcn_kernel, layer_specs=tuple(layer_specs)),
        out_shape=jax.ShapeDtypeStruct((B, c_last, L), x.dtype),
        grid=(B,),
        in_specs=in_specs,
        out_specs=pl.BlockSpec((1, c_last, L), lambda b: (b, 0, 0)),
        compiler_params=pltpu.CompilerParams(
            dimension_semantics=("parallel",)),
    )(*args)


# ------------------------------- init -------------------------------------- #

def _make_weightnorm_conv(key, c_out, c_in, k):
    """Deterministic synthetic weight_norm(Conv1d) parameters (folded)."""
    kv, kg, kb = jax.random.split(key, 3)
    v = jax.random.normal(kv, (c_out, c_in, k), jnp.float32) * 0.01
    g = 0.5 + jax.random.uniform(kg, (c_out, 1, 1), jnp.float32)
    norm = jnp.sqrt(jnp.sum(v * v, axis=(1, 2), keepdims=True))
    w = g * v / norm                         # effective weight_norm weight
    b = jax.random.normal(kb, (c_out,), jnp.float32) * 0.1
    return w, b


def init_tcn(key, num_inputs, num_channels, kernel_size):
    layers = []
    for i, c_out in enumerate(num_channels):
        c_in = num_inputs if i == 0 else num_channels[i - 1]
        key, k1, k2, k3 = jax.random.split(key, 4)
        w1, b1 = _make_weightnorm_conv(k1, c_out, c_in, kernel_size)
        w2, b2 = _make_weightnorm_conv(k2, c_out, c_out, kernel_size)
        if c_in != c_out:
            kw, kb = jax.random.split(k3)
            wd = jax.random.normal(kw, (c_out, c_in), jnp.float32) * 0.01
            bd = jax.random.normal(kb, (c_out,), jnp.float32) * 0.1
        else:
            wd, bd = None, None
        layers.append(dict(w1=w1, b1=b1, w2=w2, b2=b2, wd=wd, bd=bd,
                           dilation=2 ** i))
    return layers


# --------------------------- pure-JAX reference ---------------------------- #

def _ref_causal_conv(x, w, b, d):
    B, Cin, L = x.shape
    Cout, _, k = w.shape
    xp = jnp.pad(x, ((0, 0), (0, 0), ((k - 1) * d, 0)))
    out = jnp.zeros((B, Cout, L), jnp.float32)
    for j in range(k):
        out = out + jnp.einsum('oc,bcl->bol', w[:, :, j],
                               xp[:, :, j * d:j * d + L])
    return out + b[None, :, None]


def ref_tcn(x, layers):
    out = x
    for layer in layers:
        d = layer["dilation"]
        h = jax.nn.relu(_ref_causal_conv(out, layer["w1"], layer["b1"], d))
        h = jax.nn.relu(_ref_causal_conv(h, layer["w2"], layer["b2"], d))
        if layer["wd"] is not None:
            res = (jnp.einsum('oc,bcl->bol', layer["wd"], out)
                   + layer["bd"][None, :, None])
        else:
            res = out
        out = jax.nn.relu(h + res)
    return out


# ---------------------------------- main ----------------------------------- #

if __name__ == "__main__":
    key = jax.random.PRNGKey(0)
    kx, kp = jax.random.split(key)

    B, C_in, L = 2, 4, 128          # L multiple of 128 -> lane-dense blocks
    num_channels = [8, 8]           # block 1 has a 1x1 downsample, block 2 not
    kernel_size = 2

    x = jax.random.normal(kx, (B, C_in, L), jnp.float32)
    layers = init_tcn(kp, C_in, num_channels, kernel_size)

    out = tcn_forward_pallas(x, layers, kernel_size)
    out = jax.block_until_ready(out)

    assert out.shape == (B, num_channels[-1], L)

    ref = ref_tcn(x, layers)
    np.testing.assert_allclose(np.asarray(out), np.asarray(ref),
                               rtol=1e-5, atol=1e-5)

    print("KERNEL_OK")
</pallas_src>

<mosaic_0001>
module attributes {stable_mosaic.version = 11 : i64} {
  func.func @_tcn_kernel(%arg0: i32, %arg1: memref<1x4x128xf32, #tpu.memory_space<vmem>>, %arg2: memref<8x8xf32, #tpu.memory_space<vmem>>, %arg3: memref<8x1xf32, #tpu.memory_space<vmem>>, %arg4: memref<8x16xf32, #tpu.memory_space<vmem>>, %arg5: memref<8x1xf32, #tpu.memory_space<vmem>>, %arg6: memref<8x4xf32, #tpu.memory_space<vmem>>, %arg7: memref<8x1xf32, #tpu.memory_space<vmem>>, %arg8: memref<8x16xf32, #tpu.memory_space<vmem>>, %arg9: memref<8x1xf32, #tpu.memory_space<vmem>>, %arg10: memref<8x16xf32, #tpu.memory_space<vmem>>, %arg11: memref<8x1xf32, #tpu.memory_space<vmem>>, %arg12: memref<1x8x128xf32, #tpu.memory_space<vmem>>) attributes {dimension_semantics = [#tpu.dimension_semantics<parallel>], iteration_bounds = array<i64: 2>, scalar_prefetch = 0 : i64, scratch_operands = 0 : i64, tpu.core_type = #tpu.core_type<tc>, window_params = [{transform_indices = @transform_0, window_bounds = array<i64: 1, 4, 128>}, {pipeline_mode = #tpu.pipeline_mode<synchronous>, transform_indices = @transform_1, window_bounds = array<i64: 8, 8>}, {pipeline_mode = #tpu.pipeline_mode<synchronous>, transform_indices = @transform_2, window_bounds = array<i64: 8, 1>}, {pipeline_mode = #tpu.pipeline_mode<synchronous>, transform_indices = @transform_3, window_bounds = array<i64: 8, 16>}, {pipeline_mode = #tpu.pipeline_mode<synchronous>, transform_indices = @transform_4, window_bounds = array<i64: 8, 1>}, {pipeline_mode = #tpu.pipeline_mode<synchronous>, transform_indices = @transform_5, window_bounds = array<i64: 8, 4>}, {pipeline_mode = #tpu.pipeline_mode<synchronous>, transform_indices = @transform_6, window_bounds = array<i64: 8, 1>}, {pipeline_mode = #tpu.pipeline_mode<synchronous>, transform_indices = @transform_7, window_bounds = array<i64: 8, 16>}, {pipeline_mode = #tpu.pipeline_mode<synchronous>, transform_indices = @transform_8, window_bounds = array<i64: 8, 1>}, {pipeline_mode = #tpu.pipeline_mode<synchronous>, transform_indices = @transform_9, window_bounds = array<i64: 8, 16>}, {pipeline_mode = #tpu.pipeline_mode<synchronous>, transform_indices = @transform_10, window_bounds = array<i64: 8, 1>}, {transform_indices = @transform_11, window_bounds = array<i64: 1, 8, 128>}]} {
    %c0 = arith.constant 0 : index
    %c0_0 = arith.constant 0 : index
    %c0_1 = arith.constant 0 : index
    %0 = vector.load %arg1[%c0, %c0_0, %c0_1] : memref<1x4x128xf32, #tpu.memory_space<vmem>>, vector<1x4x128xf32>
    %1 = vector.shape_cast %0 : vector<1x4x128xf32> to vector<4x128xf32>
    %c1_i32 = arith.constant 1 : i32
    %2 = tpu.dynamic_rotate %1 by %c1_i32 dim 1 : vector<4x128xf32>, i32 -> vector<4x128xf32>
    %3 = tpu.iota {dimensions = array<i32: 1>} : vector<4x128xi32>
    %c1_i32_2 = arith.constant 1 : i32
    %4 = vector.broadcast %c1_i32_2 : i32 to vector<4x128xi32>
    %5 = arith.cmpi sge, %3, %4 : vector<4x128xi32>
    %cst = arith.constant 0.000000e+00 : f32
    %6 = vector.broadcast %cst : f32 to vector<4x128xf32>
    %7 = arith.select %5, %2, %6 : vector<4x128xi1>, vector<4x128xf32>
    %8 = tpu.concatenate %7, %1 in 0 : vector<4x128xf32>, vector<4x128xf32> -> vector<8x128xf32>
    %c0_3 = arith.constant 0 : index
    %c0_4 = arith.constant 0 : index
    %9 = vector.load %arg2[%c0_3, %c0_4] : memref<8x8xf32, #tpu.memory_space<vmem>>, vector<8x8xf32>
    %cst_5 = arith.constant dense<0.000000e+00> : vector<8x128xf32>
    %10 = tpu.matmul %9, %8, %cst_5 {dimension_numbers = #tpu.dot_dimension_numbers<[1], [0], [0], [1], [0, 0, 1, 1], [], []>} : vector<8x8xf32>, vector<8x128xf32>, vector<8x128xf32> -> vector<8x128xf32>
    %c0_6 = arith.constant 0 : index
    %c0_7 = arith.constant 0 : index
    %11 = vector.load %arg3[%c0_6, %c0_7] : memref<8x1xf32, #tpu.memory_space<vmem>>, vector<8x1xf32>
    %12 = vector.broadcast %11 : vector<8x1xf32> to vector<8x128xf32>
    %13 = arith.addf %10, %12 : vector<8x128xf32>
    %cst_8 = arith.constant 0.000000e+00 : f32
    %14 = vector.broadcast %cst_8 : f32 to vector<8x128xf32>
    %15 = arith.maximumf %13, %14 : vector<8x128xf32>
    %c1_i32_9 = arith.constant 1 : i32
    %16 = tpu.dynamic_rotate %15 by %c1_i32_9 dim 1 : vector<8x128xf32>, i32 -> vector<8x128xf32>
    %17 = tpu.iota {dimensions = array<i32: 1>} : vector<8x128xi32>
    %c1_i32_10 = arith.constant 1 : i32
    %18 = vector.broadcast %c1_i32_10 : i32 to vector<8x128xi32>
    %19 = arith.cmpi sge, %17, %18 : vector<8x128xi32>
    %cst_11 = arith.constant 0.000000e+00 : f32
    %20 = vector.broadcast %cst_11 : f32 to vector<8x128xf32>
    %21 = arith.select %19, %16, %20 : vector<8x128xi1>, vector<8x128xf32>
    %22 = tpu.concatenate %21, %15 in 0 : vector<8x128xf32>, vector<8x128xf32> -> vector<16x128xf32>
    %c0_12 = arith.constant 0 : index
    %c0_13 = arith.constant 0 : index
    %23 = vector.load %arg4[%c0_12, %c0_13] : memref<8x16xf32, #tpu.memory_space<vmem>>, vector<8x16xf32>
    %cst_14 = arith.constant dense<0.000000e+00> : vector<8x128xf32>
    %24 = tpu.matmul %23, %22, %cst_14 {dimension_numbers = #tpu.dot_dimension_numbers<[1], [0], [0], [1], [0, 0, 1, 1], [], []>} : vector<8x16xf32>, vector<16x128xf32>, vector<8x128xf32> -> vector<8x128xf32>
    %c0_15 = arith.constant 0 : index
    %c0_16 = arith.constant 0 : index
    %25 = vector.load %arg5[%c0_15, %c0_16] : memref<8x1xf32, #tpu.memory_space<vmem>>, vector<8x1xf32>
    %26 = vector.broadcast %25 : vector<8x1xf32> to vector<8x128xf32>
    %27 = arith.addf %24, %26 : vector<8x128xf32>
    %cst_17 = arith.constant 0.000000e+00 : f32
    %28 = vector.broadcast %cst_17 : f32 to vector<8x128xf32>
    %29 = arith.maximumf %27, %28 : vector<8x128xf32>
    %c0_18 = arith.constant 0 : index
    %c0_19 = arith.constant 0 : index
    %30 = vector.load %arg6[%c0_18, %c0_19] : memref<8x4xf32, #tpu.memory_space<vmem>>, vector<8x4xf32>
    %cst_20 = arith.constant dense<0.000000e+00> : vector<8x128xf32>
    %31 = tpu.matmul %30, %1, %cst_20 {dimension_numbers = #tpu.dot_dimension_numbers<[1], [0], [0], [1], [0, 0, 1, 1], [], []>} : vector<8x4xf32>, vector<4x128xf32>, vector<8x128xf32> -> vector<8x128xf32>
    %c0_21 = arith.constant 0 : index
    %c0_22 = arith.constant 0 : index
    %32 = vector.load %arg7[%c0_21, %c0_22] : memref<8x1xf32, #tpu.memory_space<vmem>>, vector<8x1xf32>
    %33 = vector.broadcast %32 : vector<8x1xf32> to vector<8x128xf32>
    %34 = arith.addf %31, %33 : vector<8x128xf32>
    %35 = arith.addf %29, %34 : vector<8x128xf32>
    %cst_23 = arith.constant 0.000000e+00 : f32
    %36 = vector.broadcast %cst_23 : f32 to vector<8x128xf32>
    %37 = arith.maximumf %35, %36 : vector<8x128xf32>
    %c2_i32 = arith.constant 2 : i32
    %38 = tpu.dynamic_rotate %37 by %c2_i32 dim 1 : vector<8x128xf32>, i32 -> vector<8x128xf32>
    %39 = tpu.iota {dimensions = array<i32: 1>} : vector<8x128xi32>
    %c2_i32_24 = arith.constant 2 : i32
    %40 = vector.broadcast %c2_i32_24 : i32 to vector<8x128xi32>
    %41 = arith.cmpi sge, %39, %40 : vector<8x128xi32>
    %cst_25 = arith.constant 0.000000e+00 : f32
    %42 = vector.broadcast %cst_25 : f32 to vector<8x128xf32>
    %43 = arith.select %41, %38, %42 : vector<8x128xi1>, vector<8x128xf32>
    %44 = tpu.concatenate %43, %37 in 0 : vector<8x128xf32>, vector<8x128xf32> -> vector<16x128xf32>
    %c0_26 = arith.constant 0 : index
    %c0_27 = arith.constant 0 : index
    %45 = vector.load %arg8[%c0_26, %c0_27] : memref<8x16xf32, #tpu.memory_space<vmem>>, vector<8x16xf32>
    %cst_28 = arith.constant dense<0.000000e+00> : vector<8x128xf32>
    %46 = tpu.matmul %45, %44, %cst_28 {dimension_numbers = #tpu.dot_dimension_numbers<[1], [0], [0], [1], [0, 0, 1, 1], [], []>} : vector<8x16xf32>, vector<16x128xf32>, vector<8x128xf32> -> vector<8x128xf32>
    %c0_29 = arith.constant 0 : index
    %c0_30 = arith.constant 0 : index
    %47 = vector.load %arg9[%c0_29, %c0_30] : memref<8x1xf32, #tpu.memory_space<vmem>>, vector<8x1xf32>
    %48 = vector.broadcast %47 : vector<8x1xf32> to vector<8x128xf32>
    %49 = arith.addf %46, %48 : vector<8x128xf32>
    %cst_31 = arith.constant 0.000000e+00 : f32
    %50 = vector.broadcast %cst_31 : f32 to vector<8x128xf32>
    %51 = arith.maximumf %49, %50 : vector<8x128xf32>
    %c2_i32_32 = arith.constant 2 : i32
    %52 = tpu.dynamic_rotate %51 by %c2_i32_32 dim 1 : vector<8x128xf32>, i32 -> vector<8x128xf32>
    %53 = tpu.iota {dimensions = array<i32: 1>} : vector<8x128xi32>
    %c2_i32_33 = arith.constant 2 : i32
    %54 = vector.broadcast %c2_i32_33 : i32 to vector<8x128xi32>
    %55 = arith.cmpi sge, %53, %54 : vector<8x128xi32>
    %cst_34 = arith.constant 0.000000e+00 : f32
    %56 = vector.broadcast %cst_34 : f32 to vector<8x128xf32>
    %57 = arith.select %55, %52, %56 : vector<8x128xi1>, vector<8x128xf32>
    %58 = tpu.concatenate %57, %51 in 0 : vector<8x128xf32>, vector<8x128xf32> -> vector<16x128xf32>
    %c0_35 = arith.constant 0 : index
    %c0_36 = arith.constant 0 : index
    %59 = vector.load %arg10[%c0_35, %c0_36] : memref<8x16xf32, #tpu.memory_space<vmem>>, vector<8x16xf32>
    %cst_37 = arith.constant dense<0.000000e+00> : vector<8x128xf32>
    %60 = tpu.matmul %59, %58, %cst_37 {dimension_numbers = #tpu.dot_dimension_numbers<[1], [0], [0], [1], [0, 0, 1, 1], [], []>} : vector<8x16xf32>, vector<16x128xf32>, vector<8x128xf32> -> vector<8x128xf32>
    %c0_38 = arith.constant 0 : index
    %c0_39 = arith.constant 0 : index
    %61 = vector.load %arg11[%c0_38, %c0_39] : memref<8x1xf32, #tpu.memory_space<vmem>>, vector<8x1xf32>
    %62 = vector.broadcast %61 : vector<8x1xf32> to vector<8x128xf32>
    %63 = arith.addf %60, %62 : vector<8x128xf32>
    %cst_40 = arith.constant 0.000000e+00 : f32
    %64 = vector.broadcast %cst_40 : f32 to vector<8x128xf32>
    %65 = arith.maximumf %63, %64 : vector<8x128xf32>
    %66 = arith.addf %65, %37 : vector<8x128xf32>
    %cst_41 = arith.constant 0.000000e+00 : f32
    %67 = vector.broadcast %cst_41 : f32 to vector<8x128xf32>
    %68 = arith.maximumf %66, %67 : vector<8x128xf32>
    %c0_42 = arith.constant 0 : index
    %c0_43 = arith.constant 0 : index
    %c0_44 = arith.constant 0 : index
    %69 = vector.load %arg12[%c0_42, %c0_43, %c0_44] : memref<1x8x128xf32, #tpu.memory_space<vmem>>, vector<1x8x128xf32>
    %70 = vector.shape_cast %69 : vector<1x8x128xf32> to vector<8x128xf32>
    %71 = vector.shape_cast %68 : vector<8x128xf32> to vector<1x8x128xf32>
    tpu.vector_store %arg12[%c0_42, %c0_43, %c0_44], %71 {strides = array<i32>} : memref<1x8x128xf32, #tpu.memory_space<vmem>>, vector<1x8x128xf32>,
    return
  }
  func.func @transform_0(%arg0: i32) -> (i32, i32, i32) {
    %c0_i32 = arith.constant 0 : i32
    %c0_i32_0 = arith.constant 0 : i32
    %c0_i32_1 = arith.constant 0 : i32
    return %arg0, %c0_i32, %c0_i32_0 : i32, i32, i32
  }
  func.func @transform_1(%arg0: i32) -> (i32, i32) {
    %c0_i32 = arith.constant 0 : i32
    %c0_i32_0 = arith.constant 0 : i32
    %c0_i32_1 = arith.constant 0 : i32
    return %c0_i32, %c0_i32_0 : i32, i32
  }
  func.func @transform_2(%arg0: i32) -> (i32, i32) {
    %c0_i32 = arith.constant 0 : i32
    %c0_i32_0 = arith.constant 0 : i32
    %c0_i32_1 = arith.constant 0 : i32
    return %c0_i32, %c0_i32_0 : i32, i32
  }
  func.func @transform_3(%arg0: i32) -> (i32, i32) {
    %c0_i32 = arith.constant 0 : i32
    %c0_i32_0 = arith.constant 0 : i32
    %c0_i32_1 = arith.constant 0 : i32
    return %c0_i32, %c0_i32_0 : i32, i32
  }
  func.func @transform_4(%arg0: i32) -> (i32, i32) {
    %c0_i32 = arith.constant 0 : i32
    %c0_i32_0 = arith.constant 0 : i32
    %c0_i32_1 = arith.constant 0 : i32
    return %c0_i32, %c0_i32_0 : i32, i32
  }
  func.func @transform_5(%arg0: i32) -> (i32, i32) {
    %c0_i32 = arith.constant 0 : i32
    %c0_i32_0 = arith.constant 0 : i32
    %c0_i32_1 = arith.constant 0 : i32
    return %c0_i32, %c0_i32_0 : i32, i32
  }
  func.func @transform_6(%arg0: i32) -> (i32, i32) {
    %c0_i32 = arith.constant 0 : i32
    %c0_i32_0 = arith.constant 0 : i32
    %c0_i32_1 = arith.constant 0 : i32
    return %c0_i32, %c0_i32_0 : i32, i32
  }
  func.func @transform_7(%arg0: i32) -> (i32, i32) {
    %c0_i32 = arith.constant 0 : i32
    %c0_i32_0 = arith.constant 0 : i32
    %c0_i32_1 = arith.constant 0 : i32
    return %c0_i32, %c0_i32_0 : i32, i32
  }
  func.func @transform_8(%arg0: i32) -> (i32, i32) {
    %c0_i32 = arith.constant 0 : i32
    %c0_i32_0 = arith.constant 0 : i32
    %c0_i32_1 = arith.constant 0 : i32
    return %c0_i32, %c0_i32_0 : i32, i32
  }
  func.func @transform_9(%arg0: i32) -> (i32, i32) {
    %c0_i32 = arith.constant 0 : i32
    %c0_i32_0 = arith.constant 0 : i32
    %c0_i32_1 = arith.constant 0 : i32
    return %c0_i32, %c0_i32_0 : i32, i32
  }
  func.func @transform_10(%arg0: i32) -> (i32, i32) {
    %c0_i32 = arith.constant 0 : i32
    %c0_i32_0 = arith.constant 0 : i32
    %c0_i32_1 = arith.constant 0 : i32
    return %c0_i32, %c0_i32_0 : i32, i32
  }
  func.func @transform_11(%arg0: i32) -> (i32, i32, i32) {
    %c0_i32 = arith.constant 0 : i32
    %c0_i32_0 = arith.constant 0 : i32
    %c0_i32_1 = arith.constant 0 : i32
    return %arg0, %c0_i32, %c0_i32_0 : i32, i32, i32
  }
}

</mosaic_0001>

<llo_original>
// kernel: tpu_custom_call.1
$region0: #{tpu_custom_call.1}
  #allocation0 [shape = 'u32[]', space=smem, size = 0x4, offset = 0x4, fixed_abs, tag = 'smem constant byte address 0x4 - core index']
  #allocation1 [shape = 'u32[72,128]{1,0:T(1,128)}', space=vmem, size = 0x9000, scoped, tag = 'internal scratch']
  %s0 = inlined_call_operand.vmem [shape: f32[2,4,128], index: 0, kind: input, shape index: {}]
  %s1 = inlined_call_operand.vmem [shape: f32[8,8], index: 1, kind: input, shape index: {}]
  %s2 = inlined_call_operand.vmem [shape: f32[8,1], index: 2, kind: input, shape index: {}]
  %s3 = inlined_call_operand.vmem [shape: f32[8,16], index: 3, kind: input, shape index: {}]
  %s4 = inlined_call_operand.vmem [shape: f32[8,1], index: 4, kind: input, shape index: {}]
  %s5 = inlined_call_operand.vmem [shape: f32[8,4], index: 5, kind: input, shape index: {}]
  %s6 = inlined_call_operand.vmem [shape: f32[8,1], index: 6, kind: input, shape index: {}]
  %s7 = inlined_call_operand.vmem [shape: f32[8,16], index: 7, kind: input, shape index: {}]
  %s8 = inlined_call_operand.vmem [shape: f32[8,1], index: 8, kind: input, shape index: {}]
  %s9 = inlined_call_operand.vmem [shape: f32[8,16], index: 9, kind: input, shape index: {}]
  %s10 = inlined_call_operand.vmem [shape: f32[8,1], index: 10, kind: input, shape index: {}]
  %s11 = inlined_call_operand.hbm [shape: f32[2,8,128], index: 11, kind: output, shape index: {}]
  %s12 = sld [smem:[#allocation0]]
  $region77: #{tpu_custom_call.1} parent=0
    _
  %s14 = ssub.s32 1, %s12
  %s15 = scalar_select 0, %s14, %s12
  $region1: #{tpu_custom_call.1} parent=0
    #allocation2 [shape = 'u8[8192]{0}', space=vmem, size = 0x2000, scoped, tag = 'output window, operand 0']
    #allocation3 [shape = 's32[2]{0}', space=sflag, size = 0x8, scoped, tag = 'scoped memory for tpu_custom_call.1']
    %16 = vsyncpa [#allocation3], 0
    %s17 = scalar_lea.sflag [#allocation3], 1
    %18 = vsyncpa %s17, 0
    loop: start=0, step=1, limit=4
    $region2: #{tpu_custom_call.1} parent=1 // loop_pre_header
      _
    $region3: #{tpu_custom_call.1} parent=1 // loop_header
      %s20 = sphi 0, %s24
      %p21 = scmp.ge.s32.totalorder %s20, 4
      %s30 = sphi 0, %s32
      %s33 = sphi 0, %s30
      %s34 = sphi 0, %s33
      %s50 = sphi 0, %s34
      %s54 = sphi 0, %s54
      %s56 = sphi 0, %s54
      %s57 = sphi 0, %s56
      %s71 = sphi 0, %s57
      %s75 = sphi 0, %s75
      %s77 = sphi 0, %s75
      %s78 = sphi 0, %s77
      %s92 = sphi 0, %s78
      %s96 = sphi 0, %s96
      %s98 = sphi 0, %s96
      %s99 = sphi 0, %s98
      %s113 = sphi 0, %s99
      %s117 = sphi 0, %s117
      %s119 = sphi 0, %s117
      %s120 = sphi 0, %s119
      %s134 = sphi 0, %s120
      %s138 = sphi 0, %s138
      %s140 = sphi 0, %s138
      %s141 = sphi 0, %s140
      %s155 = sphi 0, %s141
      %s159 = sphi 0, %s159
      %s161 = sphi 0, %s159
      %s162 = sphi 0, %s161
      %s176 = sphi 0, %s162
      %s180 = sphi 0, %s180
      %s182 = sphi 0, %s180
      %s183 = sphi 0, %s182
      %s197 = sphi 0, %s183
      %s201 = sphi 0, %s201
      %s203 = sphi 0, %s201
      %s204 = sphi 0, %s203
      %s218 = sphi 0, %s204
      %s222 = sphi 0, %s222
      %s224 = sphi 0, %s222
      %s225 = sphi 0, %s224
      %s239 = sphi 0, %s225
      %s243 = sphi 0, %s243
      %s245 = sphi 0, %s243
      %s246 = sphi 0, %s245
      %s260 = sphi 0, %s246
      %s266 = sphi 0, %s268
      %s269 = sphi 0, %s266
      %s270 = sphi 0, %s269
      %s286 = sphi 0, %s270
    $region4: #{tpu_custom_call.1} parent=1 // loop_header_branch
      %23 = sbr.rel (%p21) target = $region8
    $region5: #{tpu_custom_call.1} parent=1 // loop_body
      %s25 = ssub.s32 %s20, 1
      %s26 = ssub.s32 %s20, 2
      %s27 = sadd.s32 %s20, 1
      %s28 = ssub.s32 %s20, %s27
      %p29 = scmp.eq.s32.totalorder %s28, 0
      %s31 = sadd.s32 %s30, 1
      %s32 = scalar_select %p29, %s30, %s31
      %p35 = pneg %p29
      %p36 = scmp.eq.s32.totalorder %s20, 1
      %p37 = por %p35, %p36
      %p38 = scmp.ne.s32.totalorder %s30, %s33
      %p39 = scmp.eq.s32.totalorder %s20, 0
      %p40 = por %p38, %p39
      %p41 = scmp.ne.s32.totalorder %s30, %s33
      %p42 = scmp.eq.s32.totalorder %s25, 1
      %p43 = por %p41, %p42
      %p44 = scmp.ne.s32.totalorder %s33, %s34
      %p45 = scmp.eq.s32.totalorder %s25, 0
      %p46 = por %p44, %p45
      %p47 = scmp.ne.s32.totalorder %s33, %s34
      %p48 = scmp.eq.s32.totalorder %s26, 1
      %p49 = por %p47, %p48
      %p51 = scmp.ne.s32.totalorder %s34, %s50
      %p52 = scmp.eq.s32.totalorder %s26, 0
      %p53 = por %p51, %p52
      %s55 = sadd.s32 %s54, 1
      %p58 = scmp.eq.s32.totalorder %s20, 1
      %p59 = scmp.ne.s32.totalorder %s54, %s56
      %p60 = scmp.eq.s32.totalorder %s20, 0
      %p61 = por %p59, %p60
      %p62 = scmp.ne.s32.totalorder %s54, %s56
      %p63 = scmp.eq.s32.totalorder %s25, 1
      %p64 = por %p62, %p63
      %p65 = scmp.ne.s32.totalorder %s56, %s57
      %p66 = scmp.eq.s32.totalorder %s25, 0
      %p67 = por %p65, %p66
      %p68 = scmp.ne.s32.totalorder %s56, %s57
      %p69 = scmp.eq.s32.totalorder %s26, 1
      %p70 = por %p68, %p69
      %p72 = scmp.ne.s32.totalorder %s57, %s71
      %p73 = scmp.eq.s32.totalorder %s26, 0
      %p74 = por %p72, %p73
      %s76 = sadd.s32 %s75, 1
      %p79 = scmp.eq.s32.totalorder %s20, 1
      %p80 = scmp.ne.s32.totalorder %s75, %s77
      %p81 = scmp.eq.s32.totalorder %s20, 0
      %p82 = por %p80, %p81
      %p83 = scmp.ne.s32.totalorder %s75, %s77
      %p84 = scmp.eq.s32.totalorder %s25, 1
      %p85 = por %p83, %p84
      %p86 = scmp.ne.s32.totalorder %s77, %s78
      %p87 = scmp.eq.s32.totalorder %s25, 0
      %p88 = por %p86, %p87
      %p89 = scmp.ne.s32.totalorder %s77, %s78
      %p90 = scmp.eq.s32.totalorder %s26, 1
      %p91 = por %p89, %p90
      %p93 = scmp.ne.s32.totalorder %s78, %s92
      %p94 = scmp.eq.s32.totalorder %s26, 0
      %p95 = por %p93, %p94
      %s97 = sadd.s32 %s96, 1
      %p100 = scmp.eq.s32.totalorder %s20, 1
      %p101 = scmp.ne.s32.totalorder %s96, %s98
      %p102 = scmp.eq.s32.totalorder %s20, 0
      %p103 = por %p101, %p102
      %p104 = scmp.ne.s32.totalorder %s96, %s98
      %p105 = scmp.eq.s32.totalorder %s25, 1
      %p106 = por %p104, %p105
      %p107 = scmp.ne.s32.totalorder %s98, %s99
      %p108 = scmp.eq.s32.totalorder %s25, 0
      %p109 = por %p107, %p108
      %p110 = scmp.ne.s32.totalorder %s98, %s99
      %p111 = scmp.eq.s32.totalorder %s26, 1
      %p112 = por %p110, %p111
      %p114 = scmp.ne.s32.totalorder %s99, %s113
      %p115 = scmp.eq.s32.totalorder %s26, 0
      %p116 = por %p114, %p115
      %s118 = sadd.s32 %s117, 1
      %p121 = scmp.eq.s32.totalorder %s20, 1
      %p122 = scmp.ne.s32.totalorder %s117, %s119
      %p123 = scmp.eq.s32.totalorder %s20, 0
      %p124 = por %p122, %p123
      %p125 = scmp.ne.s32.totalorder %s117, %s119
      %p126 = scmp.eq.s32.totalorder %s25, 1
      %p127 = por %p125, %p126
      %p128 = scmp.ne.s32.totalorder %s119, %s120
      %p129 = scmp.eq.s32.totalorder %s25, 0
      %p130 = por %p128, %p129
      %p131 = scmp.ne.s32.totalorder %s119, %s120
      %p132 = scmp.eq.s32.totalorder %s26, 1
      %p133 = por %p131, %p132
      %p135 = scmp.ne.s32.totalorder %s120, %s134
      %p136 = scmp.eq.s32.totalorder %s26, 0
      %p137 = por %p135, %p136
      %s139 = sadd.s32 %s138, 1
      %p142 = scmp.eq.s32.totalorder %s20, 1
      %p143 = scmp.ne.s32.totalorder %s138, %s140
      %p144 = scmp.eq.s32.totalorder %s20, 0
      %p145 = por %p143, %p144
      %p146 = scmp.ne.s32.totalorder %s138, %s140
      %p147 = scmp.eq.s32.totalorder %s25, 1
      %p148 = por %p146, %p147
      %p149 = scmp.ne.s32.totalorder %s140, %s141
      %p150 = scmp.eq.s32.totalorder %s25, 0
      %p151 = por %p149, %p150
      %p152 = scmp.ne.s32.totalorder %s140, %s141
      %p153 = scmp.eq.s32.totalorder %s26, 1
      %p154 = por %p152, %p153
      %p156 = scmp.ne.s32.totalorder %s141, %s155
      %p157 = scmp.eq.s32.totalorder %s26, 0
      %p158 = por %p156, %p157
      %s160 = sadd.s32 %s159, 1
      %p163 = scmp.eq.s32.totalorder %s20, 1
      %p164 = scmp.ne.s32.totalorder %s159, %s161
      %p165 = scmp.eq.s32.totalorder %s20, 0
      %p166 = por %p164, %p165
      %p167 = scmp.ne.s32.totalorder %s159, %s161
      %p168 = scmp.eq.s32.totalorder %s25, 1
      %p169 = por %p167, %p168
      %p170 = scmp.ne.s32.totalorder %s161, %s162
      %p171 = scmp.eq.s32.totalorder %s25, 0
      %p172 = por %p170, %p171
      %p173 = scmp.ne.s32.totalorder %s161, %s162
      %p174 = scmp.eq.s32.totalorder %s26, 1
      %p175 = por %p173, %p174
      %p177 = scmp.ne.s32.totalorder %s162, %s176
      %p178 = scmp.eq.s32.totalorder %s26, 0
      %p179 = por %p177, %p178
      %s181 = sadd.s32 %s180, 1
      %p184 = scmp.eq.s32.totalorder %s20, 1
      %p185 = scmp.ne.s32.totalorder %s180, %s182
      %p186 = scmp.eq.s32.totalorder %s20, 0
      %p187 = por %p185, %p186
      %p188 = scmp.ne.s32.totalorder %s180, %s182
      %p189 = scmp.eq.s32.totalorder %s25, 1
      %p190 = por %p188, %p189
      %p191 = scmp.ne.s32.totalorder %s182, %s183
      %p192 = scmp.eq.s32.totalorder %s25, 0
      %p193 = por %p191, %p192
      %p194 = scmp.ne.s32.totalorder %s182, %s183
      %p195 = scmp.eq.s32.totalorder %s26, 1
      %p196 = por %p194, %p195
      %p198 = scmp.ne.s32.totalorder %s183, %s197
      %p199 = scmp.eq.s32.totalorder %s26, 0
      %p200 = por %p198, %p199
      %s202 = sadd.s32 %s201, 1
      %p205 = scmp.eq.s32.totalorder %s20, 1
      %p206 = scmp.ne.s32.totalorder %s201, %s203
      %p207 = scmp.eq.s32.totalorder %s20, 0
      %p208 = por %p206, %p207
      %p209 = scmp.ne.s32.totalorder %s201, %s203
      %p210 = scmp.eq.s32.totalorder %s25, 1
      %p211 = por %p209, %p210
      %p212 = scmp.ne.s32.totalorder %s203, %s204
      %p213 = scmp.eq.s32.totalorder %s25, 0
      %p214 = por %p212, %p213
      %p215 = scmp.ne.s32.totalorder %s203, %s204
      %p216 = scmp.eq.s32.totalorder %s26, 1
      %p217 = por %p215, %p216
      %p219 = scmp.ne.s32.totalorder %s204, %s218
      %p220 = scmp.eq.s32.totalorder %s26, 0
      %p221 = por %p219, %p220
      %s223 = sadd.s32 %s222, 1
      %p226 = scmp.eq.s32.totalorder %s20, 1
      %p227 = scmp.ne.s32.totalorder %s222, %s224
      %p228 = scmp.eq.s32.totalorder %s20, 0
      %p229 = por %p227, %p228
      %p230 = scmp.ne.s32.totalorder %s222, %s224
      %p231 = scmp.eq.s32.totalorder %s25, 1
      %p232 = por %p230, %p231
      %p233 = scmp.ne.s32.totalorder %s224, %s225
      %p234 = scmp.eq.s32.totalorder %s25, 0
      %p235 = por %p233, %p234
      %p236 = scmp.ne.s32.totalorder %s224, %s225
      %p237 = scmp.eq.s32.totalorder %s26, 1
      %p238 = por %p236, %p237
      %p240 = scmp.ne.s32.totalorder %s225, %s239
      %p241 = scmp.eq.s32.totalorder %s26, 0
      %p242 = por %p240, %p241
      %s244 = sadd.s32 %s243, 1
      %p247 = scmp.eq.s32.totalorder %s20, 1
      %p248 = scmp.ne.s32.totalorder %s243, %s245
      %p249 = scmp.eq.s32.totalorder %s20, 0
      %p250 = por %p248, %p249
      %p251 = scmp.ne.s32.totalorder %s243, %s245
      %p252 = scmp.eq.s32.totalorder %s25, 1
      %p253 = por %p251, %p252
      %p254 = scmp.ne.s32.totalorder %s245, %s246
      %p255 = scmp.eq.s32.totalorder %s25, 0
      %p256 = por %p254, %p255
      %p257 = scmp.ne.s32.totalorder %s245, %s246
      %p258 = scmp.eq.s32.totalorder %s26, 1
      %p259 = por %p257, %p258
      %p261 = scmp.ne.s32.totalorder %s246, %s260
      %p262 = scmp.eq.s32.totalorder %s26, 0
      %p263 = por %p261, %p262
      %s264 = ssub.s32 %s20, %s27
      %p265 = scmp.eq.s32.totalorder %s264, 0
      %s267 = sadd.s32 %s266, 1
      %s268 = scalar_select %p265, %s266, %s267
      %p271 = pneg %p265
      %p272 = scmp.eq.s32.totalorder %s20, 1
      %p273 = por %p271, %p272
      %p274 = scmp.ne.s32.totalorder %s266, %s269
      %p275 = scmp.eq.s32.totalorder %s20, 0
      %p276 = por %p274, %p275
      %p277 = scmp.ne.s32.totalorder %s266, %s269
      %p278 = scmp.eq.s32.totalorder %s25, 1
      %p279 = por %p277, %p278
      %p280 = scmp.ne.s32.totalorder %s269, %s270
      %p281 = scmp.eq.s32.totalorder %s25, 0
      %p282 = por %p280, %p281
      %p283 = scmp.ne.s32.totalorder %s269, %s270
      %p284 = scmp.eq.s32.totalorder %s26, 1
      %p285 = por %p283, %p284
      %p287 = scmp.ne.s32.totalorder %s270, %s286
      %p288 = scmp.eq.s32.totalorder %s26, 0
      %p289 = por %p287, %p288
      %p290 = scmp.le.s32.totalorder 1, %s20
      %p291 = scmp.lt.s32.totalorder %s20, 3
      %p292 = pnand %p290, %p291
      %p293 = pneg %p292
      // Predicated region
      $region9: #{tpu_custom_call.1} parent=5 // pred_check
        _
      $region10: #{tpu_custom_call.1} parent=5 // pred_check_branch
        %295 = sbr.rel (%p292) target = $region12
      $region11: #{tpu_custom_call.1} parent=5 // pred_region
        %s296 = ssub.s32 %s20, 1
        // Predicated region
        $region13: #{tpu_custom_call.1} parent=11 // pred_check
          %p297 = pneg %p67
        $region14: #{tpu_custom_call.1} parent=11 // pred_check_branch
          %299 = sbr.rel (%p297) target = $region16
        $region15: #{tpu_custom_call.1} parent=11 // pred_region
          _
        $region16: #{tpu_custom_call.1} parent=11 // pred_fallthru
          _
        // Predicated region
        $region17: #{tpu_custom_call.1} parent=11 // pred_check
          %p300 = pneg %p88
        $region18: #{tpu_custom_call.1} parent=11 // pred_check_branch
          %302 = sbr.rel (%p300) target = $region20
        $region19: #{tpu_custom_call.1} parent=11 // pred_region
          _
        $region20: #{tpu_custom_call.1} parent=11 // pred_fallthru
          _
        // Predicated region
        $region21: #{tpu_custom_call.1} parent=11 // pred_check
          %p303 = pneg %p109
        $region22: #{tpu_custom_call.1} parent=11 // pred_check_branch
          %305 = sbr.rel (%p303) target = $region24
        $region23: #{tpu_custom_call.1} parent=11 // pred_region
          _
        $region24: #{tpu_custom_call.1} parent=11 // pred_fallthru
          _
        // Predicated region
        $region25: #{tpu_custom_call.1} parent=11 // pred_check
          %p306 = pneg %p130
        $region26: #{tpu_custom_call.1} parent=11 // pred_check_branch
          %308 = sbr.rel (%p306) target = $region28
        $region27: #{tpu_custom_call.1} parent=11 // pred_region
          _
        $region28: #{tpu_custom_call.1} parent=11 // pred_fallthru
          _
        // Predicated region
        $region29: #{tpu_custom_call.1} parent=11 // pred_check
          %p309 = pneg %p151
        $region30: #{tpu_custom_call.1} parent=11 // pred_check_branch
          %311 = sbr.rel (%p309) target = $region32
        $region31: #{tpu_custom_call.1} parent=11 // pred_region
          _
        $region32: #{tpu_custom_call.1} parent=11 // pred_fallthru
          _
        // Predicated region
        $region33: #{tpu_custom_call.1} parent=11 // pred_check
          %p312 = pneg %p172
        $region34: #{tpu_custom_call.1} parent=11 // pred_check_branch
          %314 = sbr.rel (%p312) target = $region36
        $region35: #{tpu_custom_call.1} parent=11 // pred_region
          _
        $region36: #{tpu_custom_call.1} parent=11 // pred_fallthru
          _
        // Predicated region
        $region37: #{tpu_custom_call.1} parent=11 // pred_check
          %p315 = pneg %p193
        $region38: #{tpu_custom_call.1} parent=11 // pred_check_branch
          %317 = sbr.rel (%p315) target = $region40
        $region39: #{tpu_custom_call.1} parent=11 // pred_region
          _
        $region40: #{tpu_custom_call.1} parent=11 // pred_fallthru
          _
        // Predicated region
        $region41: #{tpu_custom_call.1} parent=11 // pred_check
          %p318 = pneg %p214
        $region42: #{tpu_custom_call.1} parent=11 // pred_check_branch
          %320 = sbr.rel (%p318) target = $region44
        $region43: #{tpu_custom_call.1} parent=11 // pred_region
          _
        $region44: #{tpu_custom_call.1} parent=11 // pred_fallthru
          _
        // Predicated region
        $region45: #{tpu_custom_call.1} parent=11 // pred_check
          %p321 = pneg %p235
        $region46: #{tpu_custom_call.1} parent=11 // pred_check_branch
          %323 = sbr.rel (%p321) target = $region48
        $region47: #{tpu_custom_call.1} parent=11 // pred_region
          _
        $region48: #{tpu_custom_call.1} parent=11 // pred_fallthru
          _
        // Predicated region
        $region49: #{tpu_custom_call.1} parent=11 // pred_check
          %p324 = pneg %p256
        $region50: #{tpu_custom_call.1} parent=11 // pred_check_branch
          %326 = sbr.rel (%p324) target = $region52
        $region51: #{tpu_custom_call.1} parent=11 // pred_region
          _
        $region52: #{tpu_custom_call.1} parent=11 // pred_fallthru
          _
      $region12: #{tpu_custom_call.1} parent=5 // pred_fallthru
        _
      %p327 = scmp.lt.s32.totalorder %s20, 2
      // Predicated region
      $region53: #{tpu_custom_call.1} parent=5 // pred_check
        %p328 = pneg %p327
      $region54: #{tpu_custom_call.1} parent=5 // pred_check_branch
        %330 = sbr.rel (%p328) target = $region56
      $region55: #{tpu_custom_call.1} parent=5 // pred_region
        // Predicated region
        $region57: #{tpu_custom_call.1} parent=55 // pred_check
          %p331 = pneg %p40
        $region58: #{tpu_custom_call.1} parent=55 // pred_check_branch
          %333 = sbr.rel (%p331) target = $region60
        $region59: #{tpu_custom_call.1} parent=55 // pred_region
          %p334 = scmp.lt.s32.totalorder %s20, 1
          %s335 = scalar_select %p334, %s20, 1
          %s336 = smul.addr %s335, 4
          %s337 = scalar_lea.vmem %s0, %s336
        $region60: #{tpu_custom_call.1} parent=55 // pred_fallthru
          _
      $region56: #{tpu_custom_call.1} parent=5 // pred_fallthru
        _
      %p338 = scmp.le.s32.totalorder 1, %s20
      %p339 = scmp.lt.s32.totalorder %s20, 3
      %p340 = pnand %p338, %p339
      %p341 = pneg %p340
      // Predicated region
      $region61: #{tpu_custom_call.1} parent=5 // pred_check
        _
      $region62: #{tpu_custom_call.1} parent=5 // pred_check_branch
        %343 = sbr.rel (%p340) target = $region64
      $region63: #{tpu_custom_call.1} parent=5 // pred_region
        %s344 = ssub.s32 %s20, 1
        %p345 = scmp.lt.s32.totalorder %s25, 1
        %s346 = scalar_select %p345, %s25, 1
        %s347 = smul.addr %s346, 4
        %s348 = scalar_lea.vmem %s0, %s347
        %p349 = pneg %p46
        %p350 = pneg %p43
        %p351 = pneg %p67
        %p352 = pneg %p64
        %p353 = pneg %p88
        %p354 = pneg %p85
        %p355 = pneg %p109
        %p356 = pneg %p106
        %p357 = pneg %p130
        %p358 = pneg %p127
        %p359 = pneg %p151
        %p360 = pneg %p148
        %p361 = pneg %p172
        %p362 = pneg %p169
        %p363 = pneg %p193
        %p364 = pneg %p190
        %p365 = pneg %p214
        %p366 = pneg %p211
        %p367 = pneg %p235
        %p368 = pneg %p232
        %p369 = pneg %p256
        %p370 = pneg %p253
        %p371 = pneg %p282
        %p372 = pneg %p279
        %s373 = sand.u32 %s269, 1
        %s374 = scalar_lea.sflag [#allocation3], %s373
        %s375 = sand.u32 %s269, 1
        %s376 = smul.addr %s375, 8
        %s377 = scalar_lea.vmem [#allocation2], %s376
        %p378 = scmp.lt.s32.totalorder %s25, 1
        %s379 = scalar_select %p378, %s25, 1
        %s380 = smul.addr %s379, 4
        %s381 = scalar_lea.vmem %s0, %s380
        %v382 = vld [vmem:[%s381] sm:$0xf]
        %383 = vrot.lane.b32.xlu0 %v382, 1
        %v384 = vpop.permute.xlu0 %383
        %v385 = vlaneseq
        %v386 = vand.u32 %v385, 127
        %vm387 = vcmp.ge.s32.totalorder %v386, 1
        %v388 = vsel %vm387, %v384, 0.0
        %v390 = vrot.slane %v382, 4
        %vm392 = vcmask 1043456
        %v393 = vsel %vm392, %v388, %v390
        %v394 = vld [vmem:[%s1] sm:$0xff]
        %v395 = vld [vmem:[%s2] sm:$0xff]
        %397 = vset.pattern.permute.xlu0 0
        %398 = vperm.xlu0 %397, %v395
        %v399 = vpop.permute.xlu0 %398
        %vm401 = vcmask 64512
        %v403 = vsel %vm401, %v394, 0
        %405 = vmatpush.msra.mxu0 0.0
        %406 = vmatpush.msra.mxu0 0.0
        %407 = vmatpush.msra.mxu0 0.0
        %408 = vmatpush.msra.mxu0 0.0
        %409 = vmatpush.msra.mxu0 0.0
        %410 = vmatpush.msra.mxu0 0.0
        %411 = vmatpush.msra.mxu0 0.0
        %412 = vmatpush.msra.mxu0 0.0
        %413 = vmatpush.msra.mxu0 0.0
        %414 = vmatpush.msra.mxu0 0.0
        %415 = vmatpush.msra.mxu0 0.0
        %416 = vmatpush.msra.mxu0 0.0
        %417 = vmatpush.msra.mxu0 0.0
        %418 = vmatpush.msra.mxu0 0.0
        %419 = vmatpush.msra.mxu0 0.0
        %420 = vmatpush.msra.mxu0 %v393
        %421 = vmatmul.f32.gmra.mxu0 %v403
        %v422 = vpop.f32.mrf.mxu0
        %v423 = vadd.f32 %v399, %v422
        %424 = vdwg.mxu0
        %v425 = vmax.f32 %v423, 0.0
        %426 = vrot.lane.b32.xlu0 %v425, 1
        %v427 = vpop.permute.xlu0 %426
        %v428 = vsel %vm387, %v427, 0.0
        %v429 = vld [vmem:[%s3] sm:$0xff]
        %v430 = vld [vmem:[%s4] sm:$0xff]
        %432 = vset.pattern.permute.xlu0 0
        %433 = vperm.xlu0 %432, %v430
        %v434 = vpop.permute.xlu0 %433
        %vm436 = vcmask 130048
        %v438 = vsel %vm436, %v429, 0
        %440 = vmatpush.msra.mxu0 0.0
        %441 = vmatpush.msra.mxu0 0.0
        %442 = vmatpush.msra.mxu0 0.0
        %443 = vmatpush.msra.mxu0 0.0
        %444 = vmatpush.msra.mxu0 0.0
        %445 = vmatpush.msra.mxu0 0.0
        %446 = vmatpush.msra.mxu0 0.0
        %447 = vmatpush.msra.mxu0 0.0
        %448 = vmatpush.msra.mxu0 0.0
        %449 = vmatpush.msra.mxu0 0.0
        %450 = vmatpush.msra.mxu0 0.0
        %451 = vmatpush.msra.mxu0 0.0
        %452 = vmatpush.msra.mxu0 0.0
        %453 = vmatpush.msra.mxu0 0.0
        %454 = vmatpush.msra.mxu0 %v425
        %455 = vmatpush.msra.mxu0 %v428
        %456 = vmatmul.f32.gmra.mxu0 %v438
        %v457 = vpop.f32.mrf.mxu0
        %v458 = vadd.f32 %v434, %v457
        %459 = vdwg.mxu0
        %v460 = vmax.f32 %v458, 0.0
        %v461 = vld [vmem:[%s5] sm:$0xff]
        %v462 = vld [vmem:[%s6] sm:$0xff]
        %464 = vset.pattern.permute.xlu0 0
        %465 = vperm.xlu0 %464, %v462
        %v466 = vpop.permute.xlu0 %465
        %vm468 = vcmask 31744
        %v470 = vsel %vm468, %v461, 0
        %v472 = vsel %vm392, %v382, 0
        %474 = vmatpush.msra.mxu0 0.0
        %475 = vmatpush.msra.mxu0 0.0
        %476 = vmatpush.msra.mxu0 0.0
        %477 = vmatpush.msra.mxu0 0.0
        %478 = vmatpush.msra.mxu0 0.0
        %479 = vmatpush.msra.mxu0 0.0
        %480 = vmatpush.msra.mxu0 0.0
        %481 = vmatpush.msra.mxu0 0.0
        %482 = vmatpush.msra.mxu0 0.0
        %483 = vmatpush.msra.mxu0 0.0
        %484 = vmatpush.msra.mxu0 0.0
        %485 = vmatpush.msra.mxu0 0.0
        %486 = vmatpush.msra.mxu0 0.0
        %487 = vmatpush.msra.mxu0 0.0
        %488 = vmatpush.msra.mxu0 0.0
        %489 = vmatpush.msra.mxu0 %v472
        %490 = vmatmul.f32.gmra.mxu0 %v470
        %v491 = vpop.f32.mrf.mxu0
        %v492 = vadd.f32 %v466, %v491
        %493 = vdwg.mxu0
        %v494 = vadd.f32 %v460, %v492
        %v495 = vmax.f32 %v494, 0.0
        %496 = vrot.lane.b32.xlu0 %v495, 2
        %v497 = vpop.permute.xlu0 %496
        %vm498 = vcmp.ge.s32.totalorder %v386, 2
        %v499 = vsel %vm498, %v497, 0.0
        %v500 = vld [vmem:[%s7] sm:$0xff]
        %v501 = vld [vmem:[%s8] sm:$0xff]
        %503 = vset.pattern.permute.xlu0 0
        %504 = vperm.xlu0 %503, %v501
        %v505 = vpop.permute.xlu0 %504
        %v508 = vsel %vm436, %v500, 0
        %510 = vmatpush.msra.mxu0 0.0
        %511 = vmatpush.msra.mxu0 0.0
        %512 = vmatpush.msra.mxu0 0.0
        %513 = vmatpush.msra.mxu0 0.0
        %514 = vmatpush.msra.mxu0 0.0
        %515 = vmatpush.msra.mxu0 0.0
        %516 = vmatpush.msra.mxu0 0.0
        %517 = vmatpush.msra.mxu0 0.0
        %518 = vmatpush.msra.mxu0 0.0
        %519 = vmatpush.msra.mxu0 0.0
        %520 = vmatpush.msra.mxu0 0.0
        %521 = vmatpush.msra.mxu0 0.0
        %522 = vmatpush.msra.mxu0 0.0
        %523 = vmatpush.msra.mxu0 0.0
        %524 = vmatpush.msra.mxu0 %v495
        %525 = vmatpush.msra.mxu0 %v499
        %526 = vmatmul.f32.gmra.mxu0 %v508
        %v527 = vpop.f32.mrf.mxu0
        %v528 = vadd.f32 %v505, %v527
        %529 = vdwg.mxu0
        %v530 = vmax.f32 %v528, 0.0
        %531 = vrot.lane.b32.xlu0 %v530, 2
        %v532 = vpop.permute.xlu0 %531
        %v533 = vsel %vm498, %v532, 0.0
        %v534 = vld [vmem:[%s9] sm:$0xff]
        %v535 = vld [vmem:[%s10] sm:$0xff]
        %537 = vset.pattern.permute.xlu0 0
        %538 = vperm.xlu0 %537, %v535
        %v539 = vpop.permute.xlu0 %538
        %v542 = vsel %vm436, %v534, 0
        %544 = vmatpush.msra.mxu0 0.0
        %545 = vmatpush.msra.mxu0 0.0
        %546 = vmatpush.msra.mxu0 0.0
        %547 = vmatpush.msra.mxu0 0.0
        %548 = vmatpush.msra.mxu0 0.0
        %549 = vmatpush.msra.mxu0 0.0
        %550 = vmatpush.msra.mxu0 0.0
        %551 = vmatpush.msra.mxu0 0.0
        %552 = vmatpush.msra.mxu0 0.0
        %553 = vmatpush.msra.mxu0 0.0
        %554 = vmatpush.msra.mxu0 0.0
        %555 = vmatpush.msra.mxu0 0.0
        %556 = vmatpush.msra.mxu0 0.0
        %557 = vmatpush.msra.mxu0 0.0
        %558 = vmatpush.msra.mxu0 %v530
        %559 = vmatpush.msra.mxu0 %v533
        %560 = vmatmul.f32.gmra.mxu0 %v542
        %v561 = vpop.f32.mrf.mxu0
        %v562 = vadd.f32 %v539, %v561
        %563 = vdwg.mxu0
        %v564 = vmax.f32 %v562, 0.0
        %v565 = vadd.f32 %v564, %v495
        %v566 = vmax.f32 %v565, 0.0
        %567 = vst [vmem:[%s377] sm:$0xff] %v566
        %s568 = sand.u32 %s269, 1
        %s569 = scalar_lea.sflag [#allocation3], %s568
        %s570 = sand.u32 %s269, 1
        %s571 = smul.addr %s570, 8
        %s572 = scalar_lea.vmem [#allocation2], %s571
        // Predicated region
        $region65: #{tpu_custom_call.1} parent=63 // pred_check
          %p573 = pneg %p279
        $region66: #{tpu_custom_call.1} parent=63 // pred_check_branch
          %575 = sbr.rel (%p573) target = $region68
        $region67: #{tpu_custom_call.1} parent=63 // pred_region
          %577 = vsyncadd %s569, 0
          %s578 = smul.addr %s25, 8
          %s579 = scalar_lea.hbm %s11, %s578
          %s581 = sshll.u32 %s572, 4
          %s582 = int_to_ptr.vmem [resolvable:$true] %s581
          %s583 = sshll.u32 %s579, 4
          %s584 = int_to_ptr.hbm [resolvable:$true] %s583
          %586 = dma.vmem_to_hbm [thread:$0]  %s582, 128, %s584, %s569
        $region68: #{tpu_custom_call.1} parent=63 // pred_fallthru
          _
      $region64: #{tpu_custom_call.1} parent=5 // pred_fallthru
        _
      %p587 = scmp.le.s32.totalorder 2, %s20
      // Predicated region
      $region69: #{tpu_custom_call.1} parent=5 // pred_check
        %p588 = pneg %p587
      $region70: #{tpu_custom_call.1} parent=5 // pred_check_branch
        %590 = sbr.rel (%p588) target = $region72
      $region71: #{tpu_custom_call.1} parent=5 // pred_region
        %s591 = ssub.s32 %s20, 2
        // Predicated region
        $region73: #{tpu_custom_call.1} parent=71 // pred_check
          %p592 = pneg %p285
        $region74: #{tpu_custom_call.1} parent=71 // pred_check_branch
          %594 = sbr.rel (%p592) target = $region76
        $region75: #{tpu_custom_call.1} parent=71 // pred_region
          %s595 = sand.u32 %s270, 1
          %s596 = scalar_lea.sflag [#allocation3], %s595
          %s597 = sand.u32 %s270, 1
          %s598 = smul.addr %s597, 8
          %s599 = scalar_lea.vmem [#allocation2], %s598
          %601 = dma.done %s596, 128
        $region76: #{tpu_custom_call.1} parent=71 // pred_fallthru
          _
      $region72: #{tpu_custom_call.1} parent=5 // pred_fallthru
        _
    $region6: #{tpu_custom_call.1} parent=1 // loop_footer
      %s24 = sadd.s32 1, %s20
    $region7: #{tpu_custom_call.1} parent=1 // loop_footer_branch
      %19 = sbr.rel target = $region3
    $region8: #{tpu_custom_call.1} parent=1 // loop_exit
      _
    %602 = vsyncpa [#allocation3], 1
    %s603 = scalar_lea.sflag [#allocation3], 1
    %604 = vsyncpa %s603, 1

</llo_original>
